<compile_context>
chip_gen: v7x
topology: tpu7x:2x2x1
jax: 0.10.0
libtpu: 0.0.40
codegen_flags: <defaults>
</compile_context>

<pallas_src>
import jax
import jax.numpy as jnp
from jax.experimental import pallas as pl
from jax.experimental.pallas import tpu as pltpu

HIDDEN = 100        # logical hidden width (matches torch module)
HIDDEN_PAD = 128    # lane-dense padded hidden width


def _round_up(n, m):
    return ((n + m - 1) // m) * m


def mlp_kernel(x_ref, w1_ref, b1_ref, w2_ref, b2_ref, w3_ref, b3_ref, out_ref):
    # Cast x to bf16 in-kernel (free); all accumulation in f32.
    x = x_ref[...].astype(jnp.bfloat16)

    # layer 1: (TB, d_in) @ (d_in, 128) -> f32, + bias, ReLU
    h1 = jnp.dot(x, w1_ref[...], preferred_element_type=jnp.float32)
    h1 = jnp.maximum(h1 + b1_ref[...], 0.0)

    # layer 2: (TB, 128) @ (128, 128) -> f32, + bias, ReLU
    h2 = jnp.dot(h1.astype(jnp.bfloat16), w2_ref[...],
                 preferred_element_type=jnp.float32)
    h2 = jnp.maximum(h2 + b2_ref[...], 0.0)

    # output layer: (TB, 128) @ (128, d_out) -> f32, + bias (no activation)
    out = jnp.dot(h2.astype(jnp.bfloat16), w3_ref[...],
                  preferred_element_type=jnp.float32)
    out_ref[...] = (out + b3_ref[...]).astype(out_ref.dtype)


def _pad2(a, rows, cols):
    return jnp.pad(a, ((0, rows - a.shape[0]), (0, cols - a.shape[1])))


def prepare_params(params):
    """One-time (outside the forward path) padding + bf16 cast of weights.

    w1: (d_in, 100) -> (d_in, 128) bf16      (K kept at d_in, only N padded)
    w2: (100, 100)  -> (128, 128) bf16
    w3: (100, d_out)-> (128, d_out) bf16     (d_out left unpadded)
    b1/b2: (1,100) -> (1,128) f32 ; b3: (1, d_out) f32 unchanged.
    Zero padding is bit-identical through bias-add/ReLU.
    """
    d_in = params["w1"].shape[0]
    d_out = params["w3"].shape[1]
    return {
        "w1": _pad2(params["w1"], d_in, HIDDEN_PAD).astype(jnp.bfloat16),
        "w2": _pad2(params["w2"], HIDDEN_PAD, HIDDEN_PAD).astype(jnp.bfloat16),
        "w3": _pad2(params["w3"], HIDDEN_PAD, d_out).astype(jnp.bfloat16),
        "b1": _pad2(params["b1"], 1, HIDDEN_PAD).astype(jnp.float32),
        "b2": _pad2(params["b2"], 1, HIDDEN_PAD).astype(jnp.float32),
        "b3": params["b3"].astype(jnp.float32),
    }


def network_forward(x, prepared, *, tile_b=2048):
    """x: (B, d_in) float32; prepared: output of prepare_params()."""
    B, d_in = x.shape
    w1, b1 = prepared["w1"], prepared["b1"]
    w2, b2 = prepared["w2"], prepared["b2"]
    w3, b3 = prepared["w3"], prepared["b3"]
    d_out = w3.shape[1]
    assert w1.shape[0] == d_in

    # Tile selection: big tiles to amortize ~0.35 us/step overhead, minimal batch
    # padding (<= 7 rows + even-split rounding), and an even tile count when >1
    # so both v7x TensorCores get work.
    n_tiles = max(1, pl.cdiv(B, tile_b))
    if n_tiles > 1 and n_tiles % 2 == 1:
        n_tiles += 1
    tb = _round_up(pl.cdiv(B, n_tiles), 8)          # f32 sublane packing = 8
    b_p = _round_up(B, tb)
    n_tiles = b_p // tb

    x_p = x if b_p == B else jnp.pad(x, ((0, b_p - B), (0, 0)))

    # Weights/biases: full blocks with a constant index_map -> VMEM-resident.
    full = lambda a: pl.BlockSpec(a.shape, lambda i: (0,) * a.ndim)

    cost = pl.CostEstimate(
        flops=2 * b_p * (d_in * HIDDEN_PAD + HIDDEN_PAD * HIDDEN_PAD
                         + HIDDEN_PAD * d_out),
        transcendentals=0,
        bytes_accessed=(x_p.size * x_p.dtype.itemsize
                        + b_p * d_out * 4
                        + w1.size * 2 + w2.size * 2 + w3.size * 2
                        + (b1.size + b2.size + b3.size) * 4),
    )

    out = pl.pallas_call(
        mlp_kernel,
        out_shape=jax.ShapeDtypeStruct((b_p, d_out), jnp.float32),
        grid=(n_tiles,),
        in_specs=[
            pl.BlockSpec((tb, d_in), lambda i: (i, 0)),   # x: streamed per batch tile
            full(w1), full(b1),
            full(w2), full(b2),
            full(w3), full(b3),
        ],
        out_specs=pl.BlockSpec((tb, d_out), lambda i: (i, 0)),  # unpadded writeback
        compiler_params=pltpu.CompilerParams(
            dimension_semantics=("parallel",),  # megacore sharding on v7x
        ),
        cost_estimate=cost,
    )(x_p, w1, b1, w2, b2, w3, b3)

    return out if b_p == B else out[:B]


def init_params(key, input_dim, output_dim, hidden=HIDDEN):
    """Deterministic init mimicking torch.nn.Linear default U[-1/sqrt(fan_in), 1/sqrt(fan_in)]."""
    ks = jax.random.split(key, 6)

    def linear(kw, kb, fan_in, fan_out):
        bound = 1.0 / jnp.sqrt(jnp.float32(fan_in))
        w = jax.random.uniform(kw, (fan_in, fan_out), jnp.float32, -bound, bound)
        b = jax.random.uniform(kb, (1, fan_out), jnp.float32, -bound, bound)
        return w, b

    w1, b1 = linear(ks[0], ks[1], input_dim, hidden)
    w2, b2 = linear(ks[2], ks[3], hidden, hidden)
    w3, b3 = linear(ks[4], ks[5], hidden, output_dim)
    return {"w1": w1, "b1": b1, "w2": w2, "b2": b2, "w3": w3, "b3": b3}


def reference_forward(x, p):
    h1 = jnp.maximum(x @ p["w1"] + p["b1"], 0.0)
    h2 = jnp.maximum(h1 @ p["w2"] + p["b2"], 0.0)
    return h2 @ p["w3"] + p["b3"]


if __name__ == "__main__":
    key = jax.random.PRNGKey(0)
    k_param, k_x = jax.random.split(key)

    input_dim, output_dim, batch = 16, 4, 8
    params = init_params(k_param, input_dim, output_dim)
    prepared = prepare_params(params)          # one-time pad + bf16 cast
    x = jax.random.normal(k_x, (batch, input_dim), jnp.float32)

    out = network_forward(x, prepared)
    out = jax.block_until_ready(out)

    ref = reference_forward(x, params)         # full f32 reference
    assert out.shape == (batch, output_dim)
    # bf16 matmul operands with f32 accumulation -> loosened tolerance vs f32 ref.
    assert jnp.allclose(out, ref, atol=5e-2, rtol=5e-2), "mismatch vs JAX reference"

    print("KERNEL_OK")
</pallas_src>

<mosaic_0001>
module attributes {stable_mosaic.version = 11 : i64} {
  func.func @mlp_kernel(%arg0: i32, %arg1: memref<8x16xf32, #tpu.memory_space<vmem>>, %arg2: memref<16x128xbf16, #tpu.memory_space<vmem>>, %arg3: memref<1x128xf32, #tpu.memory_space<vmem>>, %arg4: memref<128x128xbf16, #tpu.memory_space<vmem>>, %arg5: memref<1x128xf32, #tpu.memory_space<vmem>>, %arg6: memref<128x4xbf16, #tpu.memory_space<vmem>>, %arg7: memref<1x4xf32, #tpu.memory_space<vmem>>, %arg8: memref<8x4xf32, #tpu.memory_space<vmem>>) attributes {dimension_semantics = [#tpu.dimension_semantics<parallel>], iteration_bounds = array<i64: 1>, scalar_prefetch = 0 : i64, scratch_operands = 0 : i64, tpu.core_type = #tpu.core_type<tc>, window_params = [{transform_indices = @transform_0, window_bounds = array<i64: 8, 16>}, {pipeline_mode = #tpu.pipeline_mode<synchronous>, transform_indices = @transform_1, window_bounds = array<i64: 16, 128>}, {pipeline_mode = #tpu.pipeline_mode<synchronous>, transform_indices = @transform_2, window_bounds = array<i64: 1, 128>}, {pipeline_mode = #tpu.pipeline_mode<synchronous>, transform_indices = @transform_3, window_bounds = array<i64: 128, 128>}, {pipeline_mode = #tpu.pipeline_mode<synchronous>, transform_indices = @transform_4, window_bounds = array<i64: 1, 128>}, {pipeline_mode = #tpu.pipeline_mode<synchronous>, transform_indices = @transform_5, window_bounds = array<i64: 128, 4>}, {pipeline_mode = #tpu.pipeline_mode<synchronous>, transform_indices = @transform_6, window_bounds = array<i64: 1, 4>}, {transform_indices = @transform_7, window_bounds = array<i64: 8, 4>}]} {
    %c0 = arith.constant 0 : index
    %c0_0 = arith.constant 0 : index
    %0 = vector.load %arg1[%c0, %c0_0] : memref<8x16xf32, #tpu.memory_space<vmem>>, vector<8x16xf32>
    %1 = arith.truncf %0 : vector<8x16xf32> to vector<8x16xbf16>
    %c0_1 = arith.constant 0 : index
    %c0_2 = arith.constant 0 : index
    %2 = vector.load %arg2[%c0_1, %c0_2] : memref<16x128xbf16, #tpu.memory_space<vmem>>, vector<16x128xbf16>
    %cst = arith.constant dense<0.000000e+00> : vector<8x128xf32>
    %3 = tpu.matmul %1, %2, %cst {dimension_numbers = #tpu.dot_dimension_numbers<[1], [0], [0], [1], [0, 0, 1, 1], [], []>} : vector<8x16xbf16>, vector<16x128xbf16>, vector<8x128xf32> -> vector<8x128xf32>
    %c0_3 = arith.constant 0 : index
    %c0_4 = arith.constant 0 : index
    %4 = vector.load %arg3[%c0_3, %c0_4] : memref<1x128xf32, #tpu.memory_space<vmem>>, vector<1x128xf32>
    %5 = vector.broadcast %4 : vector<1x128xf32> to vector<8x128xf32>
    %6 = arith.addf %3, %5 : vector<8x128xf32>
    %cst_5 = arith.constant 0.000000e+00 : f32
    %7 = vector.broadcast %cst_5 : f32 to vector<8x128xf32>
    %8 = arith.maximumf %6, %7 : vector<8x128xf32>
    %9 = arith.truncf %8 : vector<8x128xf32> to vector<8x128xbf16>
    %c0_6 = arith.constant 0 : index
    %c0_7 = arith.constant 0 : index
    %10 = vector.load %arg4[%c0_6, %c0_7] : memref<128x128xbf16, #tpu.memory_space<vmem>>, vector<128x128xbf16>
    %cst_8 = arith.constant dense<0.000000e+00> : vector<8x128xf32>
    %11 = tpu.matmul %9, %10, %cst_8 {dimension_numbers = #tpu.dot_dimension_numbers<[1], [0], [0], [1], [0, 0, 1, 1], [], []>} : vector<8x128xbf16>, vector<128x128xbf16>, vector<8x128xf32> -> vector<8x128xf32>
    %c0_9 = arith.constant 0 : index
    %c0_10 = arith.constant 0 : index
    %12 = vector.load %arg5[%c0_9, %c0_10] : memref<1x128xf32, #tpu.memory_space<vmem>>, vector<1x128xf32>
    %13 = vector.broadcast %12 : vector<1x128xf32> to vector<8x128xf32>
    %14 = arith.addf %11, %13 : vector<8x128xf32>
    %cst_11 = arith.constant 0.000000e+00 : f32
    %15 = vector.broadcast %cst_11 : f32 to vector<8x128xf32>
    %16 = arith.maximumf %14, %15 : vector<8x128xf32>
    %17 = arith.truncf %16 : vector<8x128xf32> to vector<8x128xbf16>
    %c0_12 = arith.constant 0 : index
    %c0_13 = arith.constant 0 : index
    %18 = vector.load %arg6[%c0_12, %c0_13] : memref<128x4xbf16, #tpu.memory_space<vmem>>, vector<128x4xbf16>
    %cst_14 = arith.constant dense<0.000000e+00> : vector<8x4xf32>
    %19 = tpu.matmul %17, %18, %cst_14 {dimension_numbers = #tpu.dot_dimension_numbers<[1], [0], [0], [1], [0, 0, 1, 1], [], []>} : vector<8x128xbf16>, vector<128x4xbf16>, vector<8x4xf32> -> vector<8x4xf32>
    %c0_15 = arith.constant 0 : index
    %c0_16 = arith.constant 0 : index
    %20 = vector.load %arg7[%c0_15, %c0_16] : memref<1x4xf32, #tpu.memory_space<vmem>>, vector<1x4xf32>
    %21 = vector.broadcast %20 : vector<1x4xf32> to vector<8x4xf32>
    %22 = arith.addf %19, %21 : vector<8x4xf32>
    %c0_17 = arith.constant 0 : index
    %c0_18 = arith.constant 0 : index
    %23 = vector.load %arg8[%c0_17, %c0_18] : memref<8x4xf32, #tpu.memory_space<vmem>>, vector<8x4xf32>
    tpu.vector_store %arg8[%c0_17, %c0_18], %22 {strides = array<i32>} : memref<8x4xf32, #tpu.memory_space<vmem>>, vector<8x4xf32>,
    return
  }
  func.func @transform_0(%arg0: i32) -> (i32, i32) {
    %c0_i32 = arith.constant 0 : i32
    %c0_i32_0 = arith.constant 0 : i32
    return %arg0, %c0_i32 : i32, i32
  }
  func.func @transform_1(%arg0: i32) -> (i32, i32) {
    %c0_i32 = arith.constant 0 : i32
    %c0_i32_0 = arith.constant 0 : i32
    %c0_i32_1 = arith.constant 0 : i32
    return %c0_i32, %c0_i32_0 : i32, i32
  }
  func.func @transform_2(%arg0: i32) -> (i32, i32) {
    %c0_i32 = arith.constant 0 : i32
    %c0_i32_0 = arith.constant 0 : i32
    %c0_i32_1 = arith.constant 0 : i32
    return %c0_i32, %c0_i32_0 : i32, i32
  }
  func.func @transform_3(%arg0: i32) -> (i32, i32) {
    %c0_i32 = arith.constant 0 : i32
    %c0_i32_0 = arith.constant 0 : i32
    %c0_i32_1 = arith.constant 0 : i32
    return %c0_i32, %c0_i32_0 : i32, i32
  }
  func.func @transform_4(%arg0: i32) -> (i32, i32) {
    %c0_i32 = arith.constant 0 : i32
    %c0_i32_0 = arith.constant 0 : i32
    %c0_i32_1 = arith.constant 0 : i32
    return %c0_i32, %c0_i32_0 : i32, i32
  }
  func.func @transform_5(%arg0: i32) -> (i32, i32) {
    %c0_i32 = arith.constant 0 : i32
    %c0_i32_0 = arith.constant 0 : i32
    %c0_i32_1 = arith.constant 0 : i32
    return %c0_i32, %c0_i32_0 : i32, i32
  }
  func.func @transform_6(%arg0: i32) -> (i32, i32) {
    %c0_i32 = arith.constant 0 : i32
    %c0_i32_0 = arith.constant 0 : i32
    %c0_i32_1 = arith.constant 0 : i32
    return %c0_i32, %c0_i32_0 : i32, i32
  }
  func.func @transform_7(%arg0: i32) -> (i32, i32) {
    %c0_i32 = arith.constant 0 : i32
    %c0_i32_0 = arith.constant 0 : i32
    return %arg0, %c0_i32 : i32, i32
  }
}

</mosaic_0001>

<llo_original>
// kernel: tpu_custom_call.1
$region0: #{tpu_custom_call.1}
  #allocation0 [shape = 'u32[]', space=smem, size = 0x4, offset = 0x4, fixed_abs, tag = 'smem constant byte address 0x4 - core index']
  #allocation1 [shape = 'u32[144,128]{1,0:T(1,128)}', space=vmem, size = 0x12000, scoped, tag = 'internal scratch']
  %s0 = inlined_call_operand.vmem [shape: f32[8,16], index: 0, kind: input, shape index: {}]
  %s1 = inlined_call_operand.hbm [shape: bf16[16,128], index: 1, kind: input, shape index: {}]
  %s2 = inlined_call_operand.vmem [shape: f32[1,128], index: 2, kind: input, shape index: {}]
  %s3 = inlined_call_operand.vmem [shape: bf16[128,128], index: 3, kind: input, shape index: {}]
  %s4 = inlined_call_operand.vmem [shape: f32[1,128], index: 4, kind: input, shape index: {}]
  %s5 = inlined_call_operand.vmem [shape: bf16[128,4], index: 5, kind: input, shape index: {}]
  %s6 = inlined_call_operand.vmem [shape: f32[1,4], index: 6, kind: input, shape index: {}]
  %s7 = inlined_call_operand.vmem [shape: f32[8,4], index: 7, kind: output, shape index: {}]
  %s8 = sld [smem:[#allocation0]]
  $region42: #{tpu_custom_call.1} parent=0
    _
  %s10 = ssub.s32 1, %s8
  %s11 = scalar_select 0, %s10, %s8
  $region1: #{tpu_custom_call.1} parent=0
    #allocation2 [shape = 'u8[4096]{0}', space=vmem, size = 0x1000, scoped, tag = 'input window, operand 1, single buffered']
    #allocation3 [shape = 's32[1]{0}', space=sflag, size = 0x4, scoped, tag = 'scoped memory for tpu_custom_call.1']
    %12 = vsyncpa [#allocation3], 0
    // Predicated region
    $region2: #{tpu_custom_call.1} parent=1 // pred_check
      _
    $region3: #{tpu_custom_call.1} parent=1 // pred_check_branch
      %14 = sbr.rel (0) target = $region5
    $region4: #{tpu_custom_call.1} parent=1 // pred_region
      _
    $region5: #{tpu_custom_call.1} parent=1 // pred_fallthru
      _
    // Predicated region
    $region6: #{tpu_custom_call.1} parent=1 // pred_check
      _
    $region7: #{tpu_custom_call.1} parent=1 // pred_check_branch
      %16 = sbr.rel (0) target = $region9
    $region8: #{tpu_custom_call.1} parent=1 // pred_region
      %s18 = ssub.s32 128, 128
      %19 = vsyncadd [#allocation3], %s18
      %s20 = sshll.u32 [#allocation2], 4
      %s21 = int_to_ptr.vmem [resolvable:$true] %s20
      %26 = dma.hbm_to_vmem [thread:$0]  %s1, 128, %s21, [#allocation3], 64, 64, 4
    $region9: #{tpu_custom_call.1} parent=1 // pred_fallthru
      _
    // Predicated region
    $region10: #{tpu_custom_call.1} parent=1 // pred_check
      _
    $region11: #{tpu_custom_call.1} parent=1 // pred_check_branch
      %28 = sbr.rel (0) target = $region13
    $region12: #{tpu_custom_call.1} parent=1 // pred_region
      _
    $region13: #{tpu_custom_call.1} parent=1 // pred_fallthru
      _
    // Predicated region
    $region14: #{tpu_custom_call.1} parent=1 // pred_check
      _
    $region15: #{tpu_custom_call.1} parent=1 // pred_check_branch
      %30 = sbr.rel (0) target = $region17
    $region16: #{tpu_custom_call.1} parent=1 // pred_region
      _
    $region17: #{tpu_custom_call.1} parent=1 // pred_fallthru
      _
    // Predicated region
    $region18: #{tpu_custom_call.1} parent=1 // pred_check
      _
    $region19: #{tpu_custom_call.1} parent=1 // pred_check_branch
      %32 = sbr.rel (0) target = $region21
    $region20: #{tpu_custom_call.1} parent=1 // pred_region
      _
    $region21: #{tpu_custom_call.1} parent=1 // pred_fallthru
      _
    // Predicated region
    $region22: #{tpu_custom_call.1} parent=1 // pred_check
      _
    $region23: #{tpu_custom_call.1} parent=1 // pred_check_branch
      %34 = sbr.rel (0) target = $region25
    $region24: #{tpu_custom_call.1} parent=1 // pred_region
      _
    $region25: #{tpu_custom_call.1} parent=1 // pred_fallthru
      _
    // Predicated region
    $region26: #{tpu_custom_call.1} parent=1 // pred_check
      _
    $region27: #{tpu_custom_call.1} parent=1 // pred_check_branch
      %36 = sbr.rel (0) target = $region29
    $region28: #{tpu_custom_call.1} parent=1 // pred_region
      _
    $region29: #{tpu_custom_call.1} parent=1 // pred_fallthru
      _
    // Predicated region
    $region30: #{tpu_custom_call.1} parent=1 // pred_check
      _
    $region31: #{tpu_custom_call.1} parent=1 // pred_check_branch
      %38 = sbr.rel (0) target = $region33
    $region32: #{tpu_custom_call.1} parent=1 // pred_region
      %39 = dma.done [#allocation3], 128
    $region33: #{tpu_custom_call.1} parent=1 // pred_fallthru
      _
    %v41 = vld [vmem:[%s0] sm:$0xff]
    %v42 = vpack.c.bf16 %v41, %v41
    %v43 = vld [vmem:[#allocation2] sm:$0xf]
    %v44 = vld [vmem:[#allocation2 + $0x4] sm:$0xf]
    %v45 = vld [vmem:[%s2] sm:$0x1]
    %v47 = vlaneseq
    %v48 = vshrl.u32 %v47, 7
    %v49 = vsub.s32 0, %v48
    %v50 = vrot.slane %v45, %v49
    %v54 = vunpack.c.l.b16 %v43
    %v55 = vunpack.c.l.b16 %v44
    %v56 = vpack.c.b16 %v55, %v54
    %vm58 = vcmask 130048
    %v60 = vsel %vm58, %v42, 0
    %62 = vmatprep.subr.bf16.mxu0 0
    %63 = vmatpush1.bf16.msra.mxu0 %v56
    %64 = vmatprep.subr.bf16.mxu0 0
    %65 = vmatpush1.bf16.msra.mxu0 0
    %66 = vmatprep.subr.bf16.mxu0 0
    %67 = vmatpush1.bf16.msra.mxu0 0
    %68 = vmatprep.subr.bf16.mxu0 0
    %69 = vmatpush1.bf16.msra.mxu0 0
    %70 = vmatprep.subr.bf16.mxu0 0
    %71 = vmatpush1.bf16.msra.mxu0 0
    %72 = vmatprep.subr.bf16.mxu0 0
    %73 = vmatpush1.bf16.msra.mxu0 0
    %74 = vmatprep.subr.bf16.mxu0 0
    %75 = vmatpush1.bf16.msra.mxu0 0
    %76 = vmatprep.subr.bf16.mxu0 0
    %77 = vmatpush1.bf16.msra.mxu0 0
    %78 = vmatprep.subr.bf16.mxu0 0
    %79 = vmatpush1.bf16.msra.mxu0 0
    %80 = vmatprep.subr.bf16.mxu0 0
    %81 = vmatpush1.bf16.msra.mxu0 0
    %82 = vmatprep.subr.bf16.mxu0 0
    %83 = vmatpush1.bf16.msra.mxu0 0
    %84 = vmatprep.subr.bf16.mxu0 0
    %85 = vmatpush1.bf16.msra.mxu0 0
    %86 = vmatprep.subr.bf16.mxu0 0
    %87 = vmatpush1.bf16.msra.mxu0 0
    %88 = vmatprep.subr.bf16.mxu0 0
    %89 = vmatpush1.bf16.msra.mxu0 0
    %90 = vmatprep.subr.bf16.mxu0 0
    %91 = vmatpush1.bf16.msra.mxu0 0
    %92 = vmatprep.subr.bf16.mxu0 0
    %93 = vmatpush1.bf16.msra.mxu0 0
    %94 = vmatprep.mubr.bf16.mxu0 0
    %95 = vmatmul.mubr.bf16.gmra.mrb[0].mxu0 %v60
    %v96 = vpop.f32.mrb[0].mxu0
    %v97 = vadd.f32 %v50, %v96
    %v98 = vpop.f32.mrb[0].mxu0
    %v99 = vpop.f32.mrb[0].mxu0
    %v100 = vpop.f32.mrb[0].mxu0
    %101 = vdwg.mxu0
    %v102 = vmax.f32 %v97, 0.0
    %v103 = vpack.c.bf16 %v102, %v102
    %v104 = vld [vmem:[%s3] sm:$0xf]
    %v105 = vld [vmem:[%s3 + $0x4] sm:$0xf]
    %v106 = vld [vmem:[%s3 + $0x8] sm:$0xf]
    %v107 = vld [vmem:[%s3 + $0xc] sm:$0xf]
    %v108 = vld [vmem:[%s3 + $0x10] sm:$0xf]
    %v109 = vld [vmem:[%s3 + $0x14] sm:$0xf]
    %v110 = vld [vmem:[%s3 + $0x18] sm:$0xf]
    %v111 = vld [vmem:[%s3 + $0x1c] sm:$0xf]
    %v112 = vld [vmem:[%s3 + $0x20] sm:$0xf]
    %v113 = vld [vmem:[%s3 + $0x24] sm:$0xf]
    %v114 = vld [vmem:[%s3 + $0x28] sm:$0xf]
    %v115 = vld [vmem:[%s3 + $0x2c] sm:$0xf]
    %v116 = vld [vmem:[%s3 + $0x30] sm:$0xf]
    %v117 = vld [vmem:[%s3 + $0x34] sm:$0xf]
    %v118 = vld [vmem:[%s3 + $0x38] sm:$0xf]
    %v119 = vld [vmem:[%s3 + $0x3c] sm:$0xf]
    %v120 = vld [vmem:[%s4] sm:$0x1]
    %v122 = vlaneseq
    %v123 = vshrl.u32 %v122, 7
    %v124 = vsub.s32 0, %v123
    %v125 = vrot.slane %v120, %v124
    %v143 = vunpack.c.l.b16 %v104
    %v144 = vunpack.c.l.b16 %v105
    %v145 = vunpack.c.l.b16 %v106
    %v146 = vunpack.c.l.b16 %v107
    %v147 = vunpack.c.l.b16 %v108
    %v148 = vunpack.c.l.b16 %v109
    %v149 = vunpack.c.l.b16 %v110
    %v150 = vunpack.c.l.b16 %v111
    %v151 = vunpack.c.l.b16 %v112
    %v152 = vunpack.c.l.b16 %v113
    %v153 = vunpack.c.l.b16 %v114
    %v154 = vunpack.c.l.b16 %v115
    %v155 = vunpack.c.l.b16 %v116
    %v156 = vunpack.c.l.b16 %v117
    %v157 = vunpack.c.l.b16 %v118
    %v158 = vunpack.c.l.b16 %v119
    %v159 = vpack.c.b16 %v144, %v143
    %v160 = vpack.c.b16 %v146, %v145
    %v161 = vpack.c.b16 %v148, %v147
    %v162 = vpack.c.b16 %v150, %v149
    %v163 = vpack.c.b16 %v152, %v151
    %v164 = vpack.c.b16 %v154, %v153
    %v165 = vpack.c.b16 %v156, %v155
    %v166 = vpack.c.b16 %v158, %v157
    %175 = vmatprep.subr.bf16.mxu0 0
    %176 = vmatpush1.bf16.msra.mxu0 %v159
    %177 = vmatprep.subr.bf16.mxu0 0
    %178 = vmatpush1.bf16.msra.mxu0 %v160
    %179 = vmatprep.subr.bf16.mxu0 0
    %180 = vmatpush1.bf16.msra.mxu0 %v161
    %181 = vmatprep.subr.bf16.mxu0 0
    %182 = vmatpush1.bf16.msra.mxu0 %v162
    %183 = vmatprep.subr.bf16.mxu0 0
    %184 = vmatpush1.bf16.msra.mxu0 %v163
    %185 = vmatprep.subr.bf16.mxu0 0
    %186 = vmatpush1.bf16.msra.mxu0 %v164
    %187 = vmatprep.subr.bf16.mxu0 0
    %188 = vmatpush1.bf16.msra.mxu0 %v165
    %189 = vmatprep.subr.bf16.mxu0 0
    %190 = vmatpush1.bf16.msra.mxu0 %v166
    %191 = vmatprep.subr.bf16.mxu0 0
    %192 = vmatpush1.bf16.msra.mxu0 0
    %193 = vmatprep.subr.bf16.mxu0 0
    %194 = vmatpush1.bf16.msra.mxu0 0
    %195 = vmatprep.subr.bf16.mxu0 0
    %196 = vmatpush1.bf16.msra.mxu0 0
    %197 = vmatprep.subr.bf16.mxu0 0
    %198 = vmatpush1.bf16.msra.mxu0 0
    %199 = vmatprep.subr.bf16.mxu0 0
    %200 = vmatpush1.bf16.msra.mxu0 0
    %201 = vmatprep.subr.bf16.mxu0 0
    %202 = vmatpush1.bf16.msra.mxu0 0
    %203 = vmatprep.subr.bf16.mxu0 0
    %204 = vmatpush1.bf16.msra.mxu0 0
    %205 = vmatprep.subr.bf16.mxu0 0
    %206 = vmatpush1.bf16.msra.mxu0 0
    %207 = vmatprep.mubr.bf16.mxu0 0
    %208 = vmatmul.mubr.bf16.gmra.mrb[0].mxu0 %v103
    %v209 = vpop.f32.mrb[0].mxu0
    %v210 = vadd.f32 %v125, %v209
    %v211 = vpop.f32.mrb[0].mxu0
    %v212 = vpop.f32.mrb[0].mxu0
    %v213 = vpop.f32.mrb[0].mxu0
    %214 = vdwg.mxu0
    %v215 = vmax.f32 %v210, 0.0
    %v216 = vpack.c.bf16 %v215, %v215
    %v217 = vld [vmem:[%s5] sm:$0xf]
    %v218 = vld [vmem:[%s5 + $0x4] sm:$0xf]
    %v219 = vld [vmem:[%s5 + $0x8] sm:$0xf]
    %v220 = vld [vmem:[%s5 + $0xc] sm:$0xf]
    %v221 = vld [vmem:[%s5 + $0x10] sm:$0xf]
    %v222 = vld [vmem:[%s5 + $0x14] sm:$0xf]
    %v223 = vld [vmem:[%s5 + $0x18] sm:$0xf]
    %v224 = vld [vmem:[%s5 + $0x1c] sm:$0xf]
    %v225 = vld [vmem:[%s5 + $0x20] sm:$0xf]
    %v226 = vld [vmem:[%s5 + $0x24] sm:$0xf]
    %v227 = vld [vmem:[%s5 + $0x28] sm:$0xf]
    %v228 = vld [vmem:[%s5 + $0x2c] sm:$0xf]
    %v229 = vld [vmem:[%s5 + $0x30] sm:$0xf]
    %v230 = vld [vmem:[%s5 + $0x34] sm:$0xf]
    %v231 = vld [vmem:[%s5 + $0x38] sm:$0xf]
    %v232 = vld [vmem:[%s5 + $0x3c] sm:$0xf]
    %v233 = vld [vmem:[%s6] sm:$0x1]
    %v235 = vlaneseq
    %v236 = vshrl.u32 %v235, 7
    %v237 = vsub.s32 0, %v236
    %v238 = vrot.slane %v233, %v237
    %v256 = vunpack.c.l.b16 %v217
    %v257 = vunpack.c.l.b16 %v218
    %v258 = vunpack.c.l.b16 %v219
    %v259 = vunpack.c.l.b16 %v220
    %v260 = vunpack.c.l.b16 %v221
    %v261 = vunpack.c.l.b16 %v222
    %v262 = vunpack.c.l.b16 %v223
    %v263 = vunpack.c.l.b16 %v224
    %v264 = vunpack.c.l.b16 %v225
    %v265 = vunpack.c.l.b16 %v226
    %v266 = vunpack.c.l.b16 %v227
    %v267 = vunpack.c.l.b16 %v228
    %v268 = vunpack.c.l.b16 %v229
    %v269 = vunpack.c.l.b16 %v230
    %v270 = vunpack.c.l.b16 %v231
    %v271 = vunpack.c.l.b16 %v232
    %v272 = vpack.c.b16 %v257, %v256
    %v273 = vpack.c.b16 %v259, %v258
    %v274 = vpack.c.b16 %v261, %v260
    %v275 = vpack.c.b16 %v263, %v262
    %v276 = vpack.c.b16 %v265, %v264
    %v277 = vpack.c.b16 %v267, %v266
    %v278 = vpack.c.b16 %v269, %v268
    %v279 = vpack.c.b16 %v271, %v270
    %288 = vmatprep.subr.bf16.mxu0 0
    %289 = vmatpush1.bf16.msra.mxu0 %v272
    %290 = vmatprep.subr.bf16.mxu0 0
    %291 = vmatpush1.bf16.msra.mxu0 %v273
    %292 = vmatprep.subr.bf16.mxu0 0
    %293 = vmatpush1.bf16.msra.mxu0 %v274
    %294 = vmatprep.subr.bf16.mxu0 0
    %295 = vmatpush1.bf16.msra.mxu0 %v275
    %296 = vmatprep.subr.bf16.mxu0 0
    %297 = vmatpush1.bf16.msra.mxu0 %v276
    %298 = vmatprep.subr.bf16.mxu0 0
    %299 = vmatpush1.bf16.msra.mxu0 %v277
    %300 = vmatprep.subr.bf16.mxu0 0
    %301 = vmatpush1.bf16.msra.mxu0 %v278
    %302 = vmatprep.subr.bf16.mxu0 0
    %303 = vmatpush1.bf16.msra.mxu0 %v279
    %304 = vmatprep.subr.bf16.mxu0 0
    %305 = vmatpush1.bf16.msra.mxu0 0
    %306 = vmatprep.subr.bf16.mxu0 0
    %307 = vmatpush1.bf16.msra.mxu0 0
    %308 = vmatprep.subr.bf16.mxu0 0
    %309 = vmatpush1.bf16.msra.mxu0 0
    %310 = vmatprep.subr.bf16.mxu0 0
    %311 = vmatpush1.bf16.msra.mxu0 0
    %312 = vmatprep.subr.bf16.mxu0 0
    %313 = vmatpush1.bf16.msra.mxu0 0
    %314 = vmatprep.subr.bf16.mxu0 0
    %315 = vmatpush1.bf16.msra.mxu0 0
    %316 = vmatprep.subr.bf16.mxu0 0
    %317 = vmatpush1.bf16.msra.mxu0 0
    %318 = vmatprep.subr.bf16.mxu0 0
    %319 = vmatpush1.bf16.msra.mxu0 0
    %320 = vmatprep.mubr.bf16.mxu0 0
    %321 = vmatmul.mubr.bf16.gmra.mrb[0].mxu0 %v216
    %v322 = vpop.f32.mrb[0].mxu0
    %v323 = vadd.f32 %v238, %v322
    %v324 = vpop.f32.mrb[0].mxu0
    %v325 = vpop.f32.mrb[0].mxu0
    %v326 = vpop.f32.mrb[0].mxu0
    %327 = vdwg.mxu0
    %vm328 = vcmask 31744
    %329 = vst.msk [vmem:[%s7] sm:$0xff] %vm328, %v323
    // Predicated region
    $region34: #{tpu_custom_call.1} parent=1 // pred_check
      _
    $region35: #{tpu_custom_call.1} parent=1 // pred_check_branch
      %331 = sbr.rel (0) target = $region37
    $region36: #{tpu_custom_call.1} parent=1 // pred_region
      _
    $region37: #{tpu_custom_call.1} parent=1 // pred_fallthru
      _
    // Predicated region
    $region38: #{tpu_custom_call.1} parent=1 // pred_check
      _
    $region39: #{tpu_custom_call.1} parent=1 // pred_check_branch
      %333 = sbr.rel (0) target = $region41
    $region40: #{tpu_custom_call.1} parent=1 // pred_region
      _
    $region41: #{tpu_custom_call.1} parent=1 // pred_fallthru
      _
    %334 = vsyncpa [#allocation3], 1

</llo_original>
